<compile_context>
chip_gen: v6e
topology: v6e:2x2x1
jax: 0.10.0
libtpu: 0.0.40
codegen_flags: <defaults>
</compile_context>

<pallas_src>
import functools

import jax
import jax.numpy as jnp
from jax.experimental import pallas as pl
from jax.experimental.pallas import tpu as pltpu


def _attention_kernel(x_ref, wqkv_ref, wo_ref, bo_ref, o_ref, *, batch, seq):
    rows, dim = x_ref.shape          # (B*N, dim)
    inner_p = wo_ref.shape[0]        # lane-padded inner width (multiple of 128)

    # --- fused, lane-padded QKV projection (one wide bf16 MXU matmul) --------
    x2d = x_ref[...].astype(jnp.bfloat16)                       # in-kernel cast
    qkv = jnp.dot(x2d, wqkv_ref[...],
                  preferred_element_type=jnp.float32)           # (rows, 3*inner_p) f32

    # Lane-aligned static slices (each starts on a 128-lane boundary).
    # Scale is already folded into the q columns of wqkv.
    q = qkv[:, 0 * inner_p:1 * inner_p].reshape(batch, seq, inner_p).astype(jnp.bfloat16)
    k = qkv[:, 1 * inner_p:2 * inner_p].reshape(batch, seq, inner_p).astype(jnp.bfloat16)
    v = qkv[:, 2 * inner_p:3 * inner_p].reshape(batch, seq, inner_p).astype(jnp.bfloat16)

    # --- attention scores: q @ k^T without materializing k.T ------------------
    dots = jnp.einsum("bnd,bmd->bnm", q, k,
                      preferred_element_type=jnp.float32)       # (B, N, N) f32

    # --- softmax(dim=-1) in f32 (exact normalization) -------------------------
    dots = dots - jnp.max(dots, axis=-1, keepdims=True)
    p = jnp.exp(dots)
    attn = p / jnp.sum(p, axis=-1, keepdims=True)

    # --- attn @ v --------------------------------------------------------------
    out = jnp.einsum("bnm,bmd->bnd", attn.astype(jnp.bfloat16), v,
                     preferred_element_type=jnp.float32)        # (B, N, inner_p)

    # --- output projection + bias (padded rows of wo are zero) ----------------
    out2d = jnp.dot(out.reshape(rows, inner_p).astype(jnp.bfloat16), wo_ref[...],
                    preferred_element_type=jnp.float32)         # (rows, dim)
    o_ref[...] = (out2d + bo_ref[...]).astype(o_ref.dtype)


def attention_pallas(x, wq, wk, wv, wo, bo, *, scale):
    """x: (B, N, dim); wq/wk/wv: (dim, inner); wo: (inner, dim); bo: (dim,)."""
    B, N, dim = x.shape
    inner = wq.shape[1]
    inner_p = -(-inner // 128) * 128      # pad each projection to a 128-lane tile

    # Fused QKV weight, zero-padded so q/k/v each occupy their own 128-lane
    # aligned block. Softmax scale folded into the q columns (exact for the
    # power-of-two scale here; for non-power-of-two scales the rounding order
    # differs negligibly from torch, which scales the f32 scores).
    wqkv_p = jnp.zeros((dim, 3 * inner_p), jnp.float32)
    wqkv_p = wqkv_p.at[:, 0 * inner_p:0 * inner_p + inner].set(wq * scale)
    wqkv_p = wqkv_p.at[:, 1 * inner_p:1 * inner_p + inner].set(wk)
    wqkv_p = wqkv_p.at[:, 2 * inner_p:2 * inner_p + inner].set(wv)
    wqkv_p = wqkv_p.astype(jnp.bfloat16)

    wo_p = jnp.zeros((inner_p, dim), jnp.float32).at[:inner, :].set(wo)
    wo_p = wo_p.astype(jnp.bfloat16)
    bo2 = bo.reshape(1, dim).astype(jnp.float32)

    # Wrapper-side flatten: free metadata change on a contiguous HBM array.
    x2d = x.reshape(B * N, dim)

    kernel = functools.partial(_attention_kernel, batch=B, seq=N)

    out2d = pl.pallas_call(
        kernel,
        out_shape=jax.ShapeDtypeStruct((B * N, dim), jnp.float32),
        grid_spec=pltpu.PrefetchScalarGridSpec(
            num_scalar_prefetch=0,
            grid=(1,),                                            # single step: no launch overhead duplication
            in_specs=[
                pl.BlockSpec((B * N, dim), lambda i: (0, 0)),     # x (f32, cast in kernel)
                pl.BlockSpec((dim, 3 * inner_p), lambda i: (0, 0)),  # fused padded wqkv (bf16)
                pl.BlockSpec((inner_p, dim), lambda i: (0, 0)),   # padded wo (bf16)
                pl.BlockSpec((1, dim), lambda i: (0, 0)),         # bias (f32)
            ],
            out_specs=pl.BlockSpec((B * N, dim), lambda i: (0, 0)),
        ),
        compiler_params=pltpu.CompilerParams(
            dimension_semantics=("arbitrary",)),
    )(x2d, wqkv_p, wo_p, bo2)

    return out2d.reshape(B, N, dim)


# ----------------------------- references ------------------------------------

def attention_ref_f32(x, wq, wk, wv, wo, bo, *, scale):
    q = x @ wq
    k = x @ wk
    v = x @ wv
    dots = jnp.einsum("bnd,bmd->bnm", q, k) * scale
    attn = jax.nn.softmax(dots, axis=-1)
    out = jnp.einsum("bnm,bmd->bnd", attn, v)
    return out @ wo + bo


def attention_ref_bf16(x, wq, wk, wv, wo, bo, *, scale):
    """Mirrors the kernel's cast points (bf16 MXU operands, f32 accumulation,
    f32 softmax, scale folded into wq before the bf16 cast)."""
    xb = x.astype(jnp.bfloat16)
    q = jnp.dot(xb, (wq * scale).astype(jnp.bfloat16),
                preferred_element_type=jnp.float32).astype(jnp.bfloat16)
    k = jnp.dot(xb, wk.astype(jnp.bfloat16),
                preferred_element_type=jnp.float32).astype(jnp.bfloat16)
    v = jnp.dot(xb, wv.astype(jnp.bfloat16),
                preferred_element_type=jnp.float32).astype(jnp.bfloat16)
    dots = jnp.einsum("bnd,bmd->bnm", q, k, preferred_element_type=jnp.float32)
    dots = dots - jnp.max(dots, axis=-1, keepdims=True)
    p = jnp.exp(dots)
    attn = p / jnp.sum(p, axis=-1, keepdims=True)
    out = jnp.einsum("bnm,bmd->bnd", attn.astype(jnp.bfloat16), v,
                     preferred_element_type=jnp.float32)
    out = jnp.dot(out.astype(jnp.bfloat16), wo.astype(jnp.bfloat16),
                  preferred_element_type=jnp.float32)
    return out + bo


if __name__ == "__main__":
    # Shapes consistent with the module's forward:
    #   dim=32, heads=4, dim_head=16 -> inner_dim=64, batch=2, seq=8
    B, N, dim = 2, 8, 32
    heads, dim_head = 4, 16
    inner = heads * dim_head
    scale = dim_head ** (-0.5)

    key = jax.random.PRNGKey(0)
    kx, kq, kk, kv, ko, kb = jax.random.split(key, 6)

    x = jax.random.normal(kx, (B, N, dim), dtype=jnp.float32)
    # Deterministic synthetic parameters (stored as (in, out), i.e. torch W.T).
    wq = jax.random.normal(kq, (dim, inner), dtype=jnp.float32) * (dim ** -0.5)
    wk = jax.random.normal(kk, (dim, inner), dtype=jnp.float32) * (dim ** -0.5)
    wv = jax.random.normal(kv, (dim, inner), dtype=jnp.float32) * (dim ** -0.5)
    wo = jax.random.normal(ko, (inner, dim), dtype=jnp.float32) * (inner ** -0.5)
    bo = jax.random.normal(kb, (dim,), dtype=jnp.float32) * 0.01

    out = attention_pallas(x, wq, wk, wv, wo, bo, scale=scale)
    out = jax.block_until_ready(out)
    assert out.shape == (B, N, dim)

    # Tight check against a reference that applies the same bf16 cast points.
    ref_b = attention_ref_bf16(x, wq, wk, wv, wo, bo, scale=scale)
    assert jnp.allclose(out, ref_b, atol=2e-2, rtol=2e-2), "mismatch vs bf16 reference"

    # Coarse sanity check against the full-f32 reference (bf16 MXU operands =>
    # loosened tolerance).
    ref_f = attention_ref_f32(x, wq, wk, wv, wo, bo, scale=scale)
    assert jnp.allclose(out, ref_f, atol=2e-1, rtol=2e-1), "mismatch vs f32 reference"

    print("KERNEL_OK")
</pallas_src>

<mosaic_0001>
module attributes {stable_mosaic.version = 11 : i64} {
  func.func @_attention_kernel(%arg0: i32, %arg1: memref<16x32xf32, #tpu.memory_space<vmem>>, %arg2: memref<32x384xbf16, #tpu.memory_space<vmem>>, %arg3: memref<128x32xbf16, #tpu.memory_space<vmem>>, %arg4: memref<1x32xf32, #tpu.memory_space<vmem>>, %arg5: memref<16x32xf32, #tpu.memory_space<vmem>>) attributes {dimension_semantics = [#tpu.dimension_semantics<arbitrary>], iteration_bounds = array<i64: 1>, scalar_prefetch = 0 : i64, scratch_operands = 0 : i64, tpu.core_type = #tpu.core_type<tc>, window_params = [{pipeline_mode = #tpu.pipeline_mode<synchronous>, transform_indices = @transform_0, window_bounds = array<i64: 16, 32>}, {pipeline_mode = #tpu.pipeline_mode<synchronous>, transform_indices = @transform_1, window_bounds = array<i64: 32, 384>}, {pipeline_mode = #tpu.pipeline_mode<synchronous>, transform_indices = @transform_2, window_bounds = array<i64: 128, 32>}, {pipeline_mode = #tpu.pipeline_mode<synchronous>, transform_indices = @transform_3, window_bounds = array<i64: 1, 32>}, {pipeline_mode = #tpu.pipeline_mode<synchronous>, transform_indices = @transform_4, window_bounds = array<i64: 16, 32>}]} {
    %c0 = arith.constant 0 : index
    %c0_0 = arith.constant 0 : index
    %0 = vector.load %arg1[%c0, %c0_0] : memref<16x32xf32, #tpu.memory_space<vmem>>, vector<16x32xf32>
    %1 = arith.truncf %0 : vector<16x32xf32> to vector<16x32xbf16>
    %c0_1 = arith.constant 0 : index
    %c0_2 = arith.constant 0 : index
    %2 = vector.load %arg2[%c0_1, %c0_2] : memref<32x384xbf16, #tpu.memory_space<vmem>>, vector<32x384xbf16>
    %cst = arith.constant dense<0.000000e+00> : vector<16x384xf32>
    %3 = tpu.matmul %1, %2, %cst {dimension_numbers = #tpu.dot_dimension_numbers<[1], [0], [0], [1], [0, 0, 1, 1], [], []>} : vector<16x32xbf16>, vector<32x384xbf16>, vector<16x384xf32> -> vector<16x384xf32>
    %4 = vector.extract_strided_slice %3 {offsets = [0, 0], sizes = [16, 128], strides = [1, 1]} : vector<16x384xf32> to vector<16x128xf32>
    %5 = vector.shape_cast %4 : vector<16x128xf32> to vector<2x8x128xf32>
    %6 = arith.truncf %5 : vector<2x8x128xf32> to vector<2x8x128xbf16>
    %7 = vector.extract_strided_slice %3 {offsets = [0, 128], sizes = [16, 128], strides = [1, 1]} : vector<16x384xf32> to vector<16x128xf32>
    %8 = vector.shape_cast %7 : vector<16x128xf32> to vector<2x8x128xf32>
    %9 = arith.truncf %8 : vector<2x8x128xf32> to vector<2x8x128xbf16>
    %10 = vector.extract_strided_slice %3 {offsets = [0, 256], sizes = [16, 128], strides = [1, 1]} : vector<16x384xf32> to vector<16x128xf32>
    %11 = vector.shape_cast %10 : vector<16x128xf32> to vector<2x8x128xf32>
    %12 = arith.truncf %11 : vector<2x8x128xf32> to vector<2x8x128xbf16>
    "tpu.trace_start"() <{level = 10 : i32, message = "bnd,bmd->bnm"}> : () -> ()
    %cst_3 = arith.constant dense<0.000000e+00> : vector<2x8x8xf32>
    %13 = tpu.matmul %6, %9, %cst_3 {dimension_numbers = #tpu.dot_dimension_numbers<[2], [2], [1], [1], [0, 0, 0, 1, 1, 1], [0], [0]>} : vector<2x8x128xbf16>, vector<2x8x128xbf16>, vector<2x8x8xf32> -> vector<2x8x8xf32>
    "tpu.trace_stop"() : () -> ()
    %cst_4 = arith.constant dense<0xFF800000> : vector<2x8xf32>
    %14 = vector.multi_reduction <maximumf>, %13, %cst_4 [2] : vector<2x8x8xf32> to vector<2x8xf32>
    %15 = vector.shape_cast %14 : vector<2x8xf32> to vector<2x8x1xf32>
    %16 = vector.broadcast %15 : vector<2x8x1xf32> to vector<2x8x8xf32>
    %17 = arith.subf %13, %16 : vector<2x8x8xf32>
    %18 = math.exp %17 : vector<2x8x8xf32>
    %cst_5 = arith.constant dense<0.000000e+00> : vector<2x8xf32>
    %19 = vector.multi_reduction <add>, %18, %cst_5 [2] : vector<2x8x8xf32> to vector<2x8xf32>
    %20 = vector.shape_cast %19 : vector<2x8xf32> to vector<2x8x1xf32>
    %21 = vector.broadcast %20 : vector<2x8x1xf32> to vector<2x8x8xf32>
    %22 = arith.divf %18, %21 : vector<2x8x8xf32>
    %23 = arith.truncf %22 : vector<2x8x8xf32> to vector<2x8x8xbf16>
    "tpu.trace_start"() <{level = 10 : i32, message = "bnm,bmd->bnd"}> : () -> ()
    %cst_6 = arith.constant dense<0.000000e+00> : vector<2x8x128xf32>
    %24 = tpu.matmul %23, %12, %cst_6 {dimension_numbers = #tpu.dot_dimension_numbers<[2], [1], [1], [2], [0, 0, 0, 1, 1, 2], [0], [0]>} : vector<2x8x8xbf16>, vector<2x8x128xbf16>, vector<2x8x128xf32> -> vector<2x8x128xf32>
    "tpu.trace_stop"() : () -> ()
    %25 = vector.shape_cast %24 : vector<2x8x128xf32> to vector<16x128xf32>
    %26 = arith.truncf %25 : vector<16x128xf32> to vector<16x128xbf16>
    %c0_7 = arith.constant 0 : index
    %c0_8 = arith.constant 0 : index
    %27 = vector.load %arg3[%c0_7, %c0_8] : memref<128x32xbf16, #tpu.memory_space<vmem>>, vector<128x32xbf16>
    %cst_9 = arith.constant dense<0.000000e+00> : vector<16x32xf32>
    %28 = tpu.matmul %26, %27, %cst_9 {dimension_numbers = #tpu.dot_dimension_numbers<[1], [0], [0], [1], [0, 0, 1, 1], [], []>} : vector<16x128xbf16>, vector<128x32xbf16>, vector<16x32xf32> -> vector<16x32xf32>
    %c0_10 = arith.constant 0 : index
    %c0_11 = arith.constant 0 : index
    %29 = vector.load %arg4[%c0_10, %c0_11] : memref<1x32xf32, #tpu.memory_space<vmem>>, vector<1x32xf32>
    %30 = vector.broadcast %29 : vector<1x32xf32> to vector<16x32xf32>
    %31 = arith.addf %28, %30 : vector<16x32xf32>
    %c0_12 = arith.constant 0 : index
    %c0_13 = arith.constant 0 : index
    %32 = vector.load %arg5[%c0_12, %c0_13] : memref<16x32xf32, #tpu.memory_space<vmem>>, vector<16x32xf32>
    tpu.vector_store %arg5[%c0_12, %c0_13], %31 {strides = array<i32>} : memref<16x32xf32, #tpu.memory_space<vmem>>, vector<16x32xf32>,
    return
  }
  func.func @transform_0(%arg0: i32) -> (i32, i32) {
    %c0_i32 = arith.constant 0 : i32
    %c0_i32_0 = arith.constant 0 : i32
    %c0_i32_1 = arith.constant 0 : i32
    return %c0_i32, %c0_i32_0 : i32, i32
  }
  func.func @transform_1(%arg0: i32) -> (i32, i32) {
    %c0_i32 = arith.constant 0 : i32
    %c0_i32_0 = arith.constant 0 : i32
    %c0_i32_1 = arith.constant 0 : i32
    return %c0_i32, %c0_i32_0 : i32, i32
  }
  func.func @transform_2(%arg0: i32) -> (i32, i32) {
    %c0_i32 = arith.constant 0 : i32
    %c0_i32_0 = arith.constant 0 : i32
    %c0_i32_1 = arith.constant 0 : i32
    return %c0_i32, %c0_i32_0 : i32, i32
  }
  func.func @transform_3(%arg0: i32) -> (i32, i32) {
    %c0_i32 = arith.constant 0 : i32
    %c0_i32_0 = arith.constant 0 : i32
    %c0_i32_1 = arith.constant 0 : i32
    return %c0_i32, %c0_i32_0 : i32, i32
  }
  func.func @transform_4(%arg0: i32) -> (i32, i32) {
    %c0_i32 = arith.constant 0 : i32
    %c0_i32_0 = arith.constant 0 : i32
    %c0_i32_1 = arith.constant 0 : i32
    return %c0_i32, %c0_i32_0 : i32, i32
  }
}

</mosaic_0001>

<llo_original>
// kernel: tpu_custom_call.1
$region0: #{tpu_custom_call.1}
  #allocation0 [shape = 'u32[]', space=smem, size = 0x4, offset = 0x4, fixed_abs, tag = 'smem constant byte address 0x4 - core index']
  #allocation1 [shape = 'u32[144,128]{1,0:T(1,128)}', space=vmem, size = 0x12000, scoped, tag = 'internal scratch']
  %s0 = inlined_call_operand.vmem [shape: f32[16,32], index: 0, kind: input, shape index: {}]
  %s1 = inlined_call_operand.vmem [shape: bf16[32,384], index: 1, kind: input, shape index: {}]
  %s2 = inlined_call_operand.vmem [shape: bf16[128,32], index: 2, kind: input, shape index: {}]
  %s3 = inlined_call_operand.vmem [shape: f32[1,32], index: 3, kind: input, shape index: {}]
  %s4 = inlined_call_operand.hbm [shape: f32[16,32], index: 4, kind: output, shape index: {}]
  %s5 = sld [smem:[#allocation0]]
  $region26: #{tpu_custom_call.1} parent=0
    _
  %s7 = ssub.s32 1, %s5
  %s8 = scalar_select 0, %s7, %s5
  $region1: #{tpu_custom_call.1} parent=0
    #allocation2 [shape = 'u8[8192]{0}', space=vmem, size = 0x2000, scoped, tag = 'output window, operand 0, single buffered']
    #allocation3 [shape = 's32[1]{0}', space=sflag, size = 0x4, scoped, tag = 'scoped memory for tpu_custom_call.1']
    %9 = vsyncpa [#allocation3], 0
    // Predicated region
    $region2: #{tpu_custom_call.1} parent=1 // pred_check
      _
    $region3: #{tpu_custom_call.1} parent=1 // pred_check_branch
      %11 = sbr.rel (0) target = $region5
    $region4: #{tpu_custom_call.1} parent=1 // pred_region
      _
    $region5: #{tpu_custom_call.1} parent=1 // pred_fallthru
      _
    // Predicated region
    $region6: #{tpu_custom_call.1} parent=1 // pred_check
      _
    $region7: #{tpu_custom_call.1} parent=1 // pred_check_branch
      %13 = sbr.rel (0) target = $region9
    $region8: #{tpu_custom_call.1} parent=1 // pred_region
      _
    $region9: #{tpu_custom_call.1} parent=1 // pred_fallthru
      _
    // Predicated region
    $region10: #{tpu_custom_call.1} parent=1 // pred_check
      _
    $region11: #{tpu_custom_call.1} parent=1 // pred_check_branch
      %15 = sbr.rel (0) target = $region13
    $region12: #{tpu_custom_call.1} parent=1 // pred_region
      _
    $region13: #{tpu_custom_call.1} parent=1 // pred_fallthru
      _
    // Predicated region
    $region14: #{tpu_custom_call.1} parent=1 // pred_check
      _
    $region15: #{tpu_custom_call.1} parent=1 // pred_check_branch
      %17 = sbr.rel (0) target = $region17
    $region16: #{tpu_custom_call.1} parent=1 // pred_region
      _
    $region17: #{tpu_custom_call.1} parent=1 // pred_fallthru
      _
    %v19 = vld [vmem:[%s0] sm:$0xff]
    %v20 = vld [vmem:[%s0 + $0x8] sm:$0xff]
    %v21 = vpack.c.bf16 %v20, %v19
    %v22 = vld [vmem:[%s1] sm:$0xff]
    %v23 = vld [vmem:[%s1 + $0x8] sm:$0xf]
    %v24 = vld [vmem:[%s1 + $0xc] sm:$0xff]
    %v25 = vld [vmem:[%s1 + $0x14] sm:$0xf]
    %v26 = vld [vmem:[%s1 + $0x18] sm:$0xff]
    %v27 = vld [vmem:[%s1 + $0x20] sm:$0xf]
    %v28 = vld [vmem:[%s1 + $0x24] sm:$0xff]
    %v29 = vld [vmem:[%s1 + $0x2c] sm:$0xf]
    %v38 = vunpack.c.l.b16 %v22
    %v39 = vunpack.c.h.b16 %v22
    %v40 = vunpack.c.l.b16 %v23
    %v41 = vunpack.c.l.b16 %v24
    %v42 = vunpack.c.h.b16 %v24
    %v43 = vunpack.c.l.b16 %v25
    %v44 = vunpack.c.l.b16 %v26
    %v45 = vunpack.c.h.b16 %v26
    %v46 = vunpack.c.l.b16 %v27
    %v47 = vunpack.c.l.b16 %v28
    %v48 = vunpack.c.h.b16 %v28
    %v49 = vunpack.c.l.b16 %v29
    %v50 = vpack.c.b16 %v41, %v38
    %v51 = vpack.c.b16 %v42, %v39
    %v52 = vpack.c.b16 %v43, %v40
    %v53 = vpack.c.b16 %v47, %v44
    %v54 = vpack.c.b16 %v48, %v45
    %v55 = vpack.c.b16 %v49, %v46
    %vm62 = vcmask 261120
    %v64 = vsel %vm62, %v21, 0
    %66 = vmatprep.subr.bf16.mxu0 0
    %67 = vmatpush1.bf16.msra.mxu0 0
    %68 = vmatprep.subr.bf16.mxu0 0
    %69 = vmatpush1.bf16.msra.mxu0 0
    %70 = vmatprep.subr.bf16.mxu0 0
    %71 = vmatpush1.bf16.msra.mxu0 0
    %72 = vmatprep.subr.bf16.mxu0 0
    %73 = vmatpush1.bf16.msra.mxu0 0
    %74 = vmatprep.subr.bf16.mxu0 0
    %75 = vmatpush1.bf16.msra.mxu0 0
    %76 = vmatprep.subr.bf16.mxu0 0
    %77 = vmatpush1.bf16.msra.mxu0 0
    %78 = vmatprep.subr.bf16.mxu0 %v54
    %79 = vmatpush1.bf16.msra.mxu0 %v53
    %80 = vmatprep.subr.bf16.mxu0 %v51
    %81 = vmatpush1.bf16.msra.mxu0 %v50
    %82 = vmatprep.subr.bf16.mxu0 0
    %83 = vmatpush2.bf16.msra.mxu0 0
    %84 = vmatprep.subr.bf16.mxu0 0
    %85 = vmatpush2.bf16.msra.mxu0 0
    %86 = vmatprep.subr.bf16.mxu0 0
    %87 = vmatpush2.bf16.msra.mxu0 0
    %88 = vmatprep.subr.bf16.mxu0 0
    %89 = vmatpush2.bf16.msra.mxu0 0
    %90 = vmatprep.subr.bf16.mxu0 0
    %91 = vmatpush2.bf16.msra.mxu0 0
    %92 = vmatprep.subr.bf16.mxu0 0
    %93 = vmatpush2.bf16.msra.mxu0 0
    %94 = vmatprep.subr.bf16.mxu0 0
    %95 = vmatpush2.bf16.msra.mxu0 0
    %96 = vmatprep.subr.bf16.mxu0 0
    %97 = vmatpush2.bf16.msra.mxu0 0
    %98 = vmatprep.mubr.bf16.mxu0 0
    %99 = vmatmul.mubr.bf16.gmra.mxu0 %v64
    %v100 = vpop.f32.mrf.mxu0
    %v101 = vadd.f32 0.0, %v100
    %v102 = vpop.f32.mrf.mxu0
    %v103 = vadd.f32 0.0, %v102
    %v104 = vpop.f32.mrf.mxu0
    %v105 = vadd.f32 0.0, %v104
    %v106 = vpop.f32.mrf.mxu0
    %v107 = vadd.f32 0.0, %v106
    %108 = vdwg.mxu0
    %109 = vmatprep.subr.bf16.mxu0 0
    %110 = vmatpush1.bf16.msra.mxu0 0
    %111 = vmatprep.subr.bf16.mxu0 0
    %112 = vmatpush1.bf16.msra.mxu0 0
    %113 = vmatprep.subr.bf16.mxu0 0
    %114 = vmatpush1.bf16.msra.mxu0 0
    %115 = vmatprep.subr.bf16.mxu0 0
    %116 = vmatpush1.bf16.msra.mxu0 0
    %117 = vmatprep.subr.bf16.mxu0 0
    %118 = vmatpush1.bf16.msra.mxu0 0
    %119 = vmatprep.subr.bf16.mxu0 0
    %120 = vmatpush1.bf16.msra.mxu0 0
    %121 = vmatprep.subr.bf16.mxu0 0
    %122 = vmatpush1.bf16.msra.mxu0 %v55
    %123 = vmatprep.subr.bf16.mxu0 0
    %124 = vmatpush1.bf16.msra.mxu0 %v52
    %125 = vmatprep.subr.bf16.mxu0 0
    %126 = vmatpush2.bf16.msra.mxu0 0
    %127 = vmatprep.subr.bf16.mxu0 0
    %128 = vmatpush2.bf16.msra.mxu0 0
    %129 = vmatprep.subr.bf16.mxu0 0
    %130 = vmatpush2.bf16.msra.mxu0 0
    %131 = vmatprep.subr.bf16.mxu0 0
    %132 = vmatpush2.bf16.msra.mxu0 0
    %133 = vmatprep.subr.bf16.mxu0 0
    %134 = vmatpush2.bf16.msra.mxu0 0
    %135 = vmatprep.subr.bf16.mxu0 0
    %136 = vmatpush2.bf16.msra.mxu0 0
    %137 = vmatprep.subr.bf16.mxu0 0
    %138 = vmatpush2.bf16.msra.mxu0 0
    %139 = vmatprep.subr.bf16.mxu0 0
    %140 = vmatpush2.bf16.msra.mxu0 0
    %141 = vmatprep.mubr.bf16.mxu0 0
    %142 = vmatmul.mubr.bf16.gmra.mxu0 %v64
    %v143 = vpop.f32.mrf.mxu0
    %v144 = vadd.f32 0.0, %v143
    %v145 = vpop.f32.mrf.mxu0
    %v146 = vpop.f32.mrf.mxu0
    %v147 = vadd.f32 0.0, %v146
    %v148 = vpop.f32.mrf.mxu0
    %149 = vdwg.mxu0
    %v150 = vpack.c.bf16 %v101, %v101
    %v151 = vpack.c.bf16 %v105, %v105
    %v152 = vpack.c.bf16 %v103, %v103
    %v153 = vpack.c.bf16 %v107, %v107
    %v154 = vpack.c.bf16 %v144, %v144
    %v155 = vpack.c.bf16 %v147, %v147
    %156 = vmatprep.subr.bf16.mxu0 0
    %157 = vmatpush1.bf16.xpose.msra.mxu0 0
    %158 = vmatprep.subr.bf16.mxu0 0
    %159 = vmatpush1.bf16.xpose.msra.mxu0 0
    %160 = vmatprep.subr.bf16.mxu0 0
    %161 = vmatpush1.bf16.xpose.msra.mxu0 0
    %162 = vmatprep.subr.bf16.mxu0 0
    %163 = vmatpush1.bf16.xpose.msra.mxu0 0
    %164 = vmatprep.subr.bf16.mxu0 0
    %165 = vmatpush1.bf16.xpose.msra.mxu0 0
    %166 = vmatprep.subr.bf16.mxu0 0
    %167 = vmatpush1.bf16.xpose.msra.mxu0 0
    %168 = vmatprep.subr.bf16.mxu0 0
    %169 = vmatpush1.bf16.xpose.msra.mxu0 0
    %170 = vmatprep.subr.bf16.mxu0 0
    %171 = vmatpush1.bf16.xpose.msra.mxu0 %v152
    %172 = vmatprep.subr.bf16.mxu0 0
    %173 = vmatpush2.bf16.xpose.msra.mxu0 0
    %174 = vmatprep.subr.bf16.mxu0 0
    %175 = vmatpush2.bf16.xpose.msra.mxu0 0
    %176 = vmatprep.subr.bf16.mxu0 0
    %177 = vmatpush2.bf16.xpose.msra.mxu0 0
    %178 = vmatprep.subr.bf16.mxu0 0
    %179 = vmatpush2.bf16.xpose.msra.mxu0 0
    %180 = vmatprep.subr.bf16.mxu0 0
    %181 = vmatpush2.bf16.xpose.msra.mxu0 0
    %182 = vmatprep.subr.bf16.mxu0 0
    %183 = vmatpush2.bf16.xpose.msra.mxu0 0
    %184 = vmatprep.subr.bf16.mxu0 0
    %185 = vmatpush2.bf16.xpose.msra.mxu0 0
    %186 = vmatprep.subr.bf16.mxu0 0
    %187 = vmatpush2.bf16.xpose.msra.mxu0 0
    %188 = vmatprep.mubr.bf16.mxu0 0
    %189 = vmatmul.mubr.bf16.gmra.mxu0 %v150
    %v190 = vpop.f32.mrf.mxu0
    %v191 = vadd.f32 0.0, %v190
    %v192 = vpop.f32.mrf.mxu0
    %v193 = vpop.f32.mrf.mxu0
    %v194 = vpop.f32.mrf.mxu0
    %195 = vdwg.mxu0
    %196 = vmatprep.subr.bf16.mxu0 0
    %197 = vmatpush1.bf16.xpose.msra.mxu0 0
    %198 = vmatprep.subr.bf16.mxu0 0
    %199 = vmatpush1.bf16.xpose.msra.mxu0 0
    %200 = vmatprep.subr.bf16.mxu0 0
    %201 = vmatpush1.bf16.xpose.msra.mxu0 0
    %202 = vmatprep.subr.bf16.mxu0 0
    %203 = vmatpush1.bf16.xpose.msra.mxu0 0
    %204 = vmatprep.subr.bf16.mxu0 0
    %205 = vmatpush1.bf16.xpose.msra.mxu0 0
    %206 = vmatprep.subr.bf16.mxu0 0
    %207 = vmatpush1.bf16.xpose.msra.mxu0 0
    %208 = vmatprep.subr.bf16.mxu0 0
    %209 = vmatpush1.bf16.xpose.msra.mxu0 0
    %210 = vmatprep.subr.bf16.mxu0 0
    %211 = vmatpush1.bf16.xpose.msra.mxu0 %v153
    %212 = vmatprep.subr.bf16.mxu0 0
    %213 = vmatpush2.bf16.xpose.msra.mxu0 0
    %214 = vmatprep.subr.bf16.mxu0 0
    %215 = vmatpush2.bf16.xpose.msra.mxu0 0
    %216 = vmatprep.subr.bf16.mxu0 0
    %217 = vmatpush2.bf16.xpose.msra.mxu0 0
    %218 = vmatprep.subr.bf16.mxu0 0
    %219 = vmatpush2.bf16.xpose.msra.mxu0 0
    %220 = vmatprep.subr.bf16.mxu0 0
    %221 = vmatpush2.bf16.xpose.msra.mxu0 0
    %222 = vmatprep.subr.bf16.mxu0 0
    %223 = vmatpush2.bf16.xpose.msra.mxu0 0
    %224 = vmatprep.subr.bf16.mxu0 0
    %225 = vmatpush2.bf16.xpose.msra.mxu0 0
    %226 = vmatprep.subr.bf16.mxu0 0
    %227 = vmatpush2.bf16.xpose.msra.mxu0 0
    %228 = vmatprep.mubr.bf16.mxu0 0
    %229 = vmatmul.mubr.bf16.gmra.mxu0 %v151
    %v230 = vpop.f32.mrf.mxu0
    %v231 = vadd.f32 0.0, %v230
    %v232 = vpop.f32.mrf.mxu0
    %v233 = vpop.f32.mrf.mxu0
    %v234 = vpop.f32.mrf.mxu0
    %235 = vdwg.mxu0
    %vm236 = vcmask 64512
    %v237 = vsel %vm236, %v191, -inf
    %238 = vmax.xlane.f32.xlu0 %v237
    %v239 = vpop.xlane.xlu0 %238
    %v240 = vsel %vm236, %v231, -inf
    %241 = vmax.xlane.f32.xlu0 %v240
    %v242 = vpop.xlane.xlu0 %241
    %v243 = vsub.f32 %v191, %v239
    %v244 = vsub.f32 %v231, %v242
    %v245 = vmul.f32 %v243, 1.442695
    %v246 = vpow.pop %v245
    %v247 = vmul.f32 %v244, 1.442695
    %v248 = vpow.pop %v247
    %v249 = vsel %vm236, %v246, 0.0
    %250 = vadd.xlane.f32.xlu0 %v249
    %v251 = vpop.xlane.xlu0 %250
    %v252 = vsel %vm236, %v248, 0.0
    %253 = vadd.xlane.f32.xlu0 %v252
    %v254 = vpop.xlane.xlu0 %253
    %v255 = vrcp.pop %v251
    %v256 = vmul.f32 %v246, %v255
    %v257 = vrcp.pop %v254
    %v258 = vmul.f32 %v248, %v257
    %v259 = vpack.c.bf16 %v256, %v256
    %v260 = vpack.c.bf16 %v258, %v258
    %v262 = vsel %vm236, %v259, 0
    %vm264 = vcmask 1043456
    %v266 = vsel %vm264, %v154, 0
    %268 = vmatprep.subr.bf16.mxu0 0
    %269 = vmatpush1.bf16.msra.mxu0 0
    %270 = vmatprep.subr.bf16.mxu0 0
    %271 = vmatpush1.bf16.msra.mxu0 0
    %272 = vmatprep.subr.bf16.mxu0 0
    %273 = vmatpush1.bf16.msra.mxu0 0
    %274 = vmatprep.subr.bf16.mxu0 0
    %275 = vmatpush1.bf16.msra.mxu0 0
    %276 = vmatprep.subr.bf16.mxu0 0
    %277 = vmatpush1.bf16.msra.mxu0 0
    %278 = vmatprep.subr.bf16.mxu0 0
    %279 = vmatpush1.bf16.msra.mxu0 0
    %280 = vmatprep.subr.bf16.mxu0 0
    %281 = vmatpush1.bf16.msra.mxu0 0
    %282 = vmatprep.subr.bf16.mxu0 0
    %283 = vmatpush1.bf16.msra.mxu0 %v266
    %284 = vmatprep.subr.bf16.mxu0 0
    %285 = vmatpush2.bf16.msra.mxu0 0
    %286 = vmatprep.subr.bf16.mxu0 0
    %287 = vmatpush2.bf16.msra.mxu0 0
    %288 = vmatprep.subr.bf16.mxu0 0
    %289 = vmatpush2.bf16.msra.mxu0 0
    %290 = vmatprep.subr.bf16.mxu0 0
    %291 = vmatpush2.bf16.msra.mxu0 0
    %292 = vmatprep.subr.bf16.mxu0 0
    %293 = vmatpush2.bf16.msra.mxu0 0
    %294 = vmatprep.subr.bf16.mxu0 0
    %295 = vmatpush2.bf16.msra.mxu0 0
    %296 = vmatprep.subr.bf16.mxu0 0
    %297 = vmatpush2.bf16.msra.mxu0 0
    %298 = vmatprep.subr.bf16.mxu0 0
    %299 = vmatpush2.bf16.msra.mxu0 0
    %300 = vmatprep.mubr.bf16.mxu0 0
    %301 = vmatmul.mubr.bf16.gmra.mxu0 %v262
    %v302 = vpop.f32.mrf.mxu0
    %v303 = vadd.f32 0.0, %v302
    %v304 = vpop.f32.mrf.mxu0
    %v305 = vpop.f32.mrf.mxu0
    %v306 = vpop.f32.mrf.mxu0
    %307 = vdwg.mxu0
    %v309 = vsel %vm236, %v260, 0
    %v312 = vsel %vm264, %v155, 0
    %314 = vmatprep.subr.bf16.mxu0 0
    %315 = vmatpush1.bf16.msra.mxu0 0
    %316 = vmatprep.subr.bf16.mxu0 0
    %317 = vmatpush1.bf16.msra.mxu0 0
    %318 = vmatprep.subr.bf16.mxu0 0
    %319 = vmatpush1.bf16.msra.mxu0 0
    %320 = vmatprep.subr.bf16.mxu0 0
    %321 = vmatpush1.bf16.msra.mxu0 0
    %322 = vmatprep.subr.bf16.mxu0 0
    %323 = vmatpush1.bf16.msra.mxu0 0
    %324 = vmatprep.subr.bf16.mxu0 0
    %325 = vmatpush1.bf16.msra.mxu0 0
    %326 = vmatprep.subr.bf16.mxu0 0
    %327 = vmatpush1.bf16.msra.mxu0 0
    %328 = vmatprep.subr.bf16.mxu0 0
    %329 = vmatpush1.bf16.msra.mxu0 %v312
    %330 = vmatprep.subr.bf16.mxu0 0
    %331 = vmatpush2.bf16.msra.mxu0 0
    %332 = vmatprep.subr.bf16.mxu0 0
    %333 = vmatpush2.bf16.msra.mxu0 0
    %334 = vmatprep.subr.bf16.mxu0 0
    %335 = vmatpush2.bf16.msra.mxu0 0
    %336 = vmatprep.subr.bf16.mxu0 0
    %337 = vmatpush2.bf16.msra.mxu0 0
    %338 = vmatprep.subr.bf16.mxu0 0
    %339 = vmatpush2.bf16.msra.mxu0 0
    %340 = vmatprep.subr.bf16.mxu0 0
    %341 = vmatpush2.bf16.msra.mxu0 0
    %342 = vmatprep.subr.bf16.mxu0 0
    %343 = vmatpush2.bf16.msra.mxu0 0
    %344 = vmatprep.subr.bf16.mxu0 0
    %345 = vmatpush2.bf16.msra.mxu0 0
    %346 = vmatprep.mubr.bf16.mxu0 0
    %347 = vmatmul.mubr.bf16.gmra.mxu0 %v309
    %v348 = vpop.f32.mrf.mxu0
    %v349 = vadd.f32 0.0, %v348
    %v350 = vpop.f32.mrf.mxu0
    %v351 = vpop.f32.mrf.mxu0
    %v352 = vpop.f32.mrf.mxu0
    %353 = vdwg.mxu0
    %v354 = vpack.c.bf16 %v349, %v303
    %v355 = vld [vmem:[%s2] sm:$0xf]
    %v356 = vld [vmem:[%s2 + $0x4] sm:$0xf]
    %v357 = vld [vmem:[%s2 + $0x8] sm:$0xf]
    %v358 = vld [vmem:[%s2 + $0xc] sm:$0xf]
    %v359 = vld [vmem:[%s2 + $0x10] sm:$0xf]
    %v360 = vld [vmem:[%s2 + $0x14] sm:$0xf]
    %v361 = vld [vmem:[%s2 + $0x18] sm:$0xf]
    %v362 = vld [vmem:[%s2 + $0x1c] sm:$0xf]
    %v363 = vld [vmem:[%s2 + $0x20] sm:$0xf]
    %v364 = vld [vmem:[%s2 + $0x24] sm:$0xf]
    %v365 = vld [vmem:[%s2 + $0x28] sm:$0xf]
    %v366 = vld [vmem:[%s2 + $0x2c] sm:$0xf]
    %v367 = vld [vmem:[%s2 + $0x30] sm:$0xf]
    %v368 = vld [vmem:[%s2 + $0x34] sm:$0xf]
    %v369 = vld [vmem:[%s2 + $0x38] sm:$0xf]
    %v370 = vld [vmem:[%s2 + $0x3c] sm:$0xf]
    %v371 = vld [vmem:[%s3] sm:$0x1]
    %v373 = vlaneseq
    %v374 = vshrl.u32 %v373, 7
    %v375 = vsub.s32 0, %v374
    %v376 = vrot.slane %v371, %v375
    %v394 = vunpack.c.l.b16 %v355
    %v395 = vunpack.c.l.b16 %v356
    %v396 = vunpack.c.l.b16 %v357
    %v397 = vunpack.c.l.b16 %v358
    %v398 = vunpack.c.l.b16 %v359
    %v399 = vunpack.c.l.b16 %v360
    %v400 = vunpack.c.l.b16 %v361
    %v401 = vunpack.c.l.b16 %v362
    %v402 = vunpack.c.l.b16 %v363
    %v403 = vunpack.c.l.b16 %v364
    %v404 = vunpack.c.l.b16 %v365
    %v405 = vunpack.c.l.b16 %v366
    %v406 = vunpack.c.l.b16 %v367
    %v407 = vunpack.c.l.b16 %v368
    %v408 = vunpack.c.l.b16 %v369
    %v409 = vunpack.c.l.b16 %v370
    %v410 = vpack.c.b16 %v395, %v394
    %v411 = vpack.c.b16 %v397, %v396
    %v412 = vpack.c.b16 %v399, %v398
    %v413 = vpack.c.b16 %v401, %v400
    %v414 = vpack.c.b16 %v403, %v402
    %v415 = vpack.c.b16 %v405, %v404
    %v416 = vpack.c.b16 %v407, %v406
    %v417 = vpack.c.b16 %v409, %v408
    %426 = vmatprep.subr.bf16.mxu0 0
    %427 = vmatpush1.bf16.msra.mxu0 %v417
    %428 = vmatprep.subr.bf16.mxu0 0
    %429 = vmatpush1.bf16.msra.mxu0 %v416
    %430 = vmatprep.subr.bf16.mxu0 0
    %431 = vmatpush1.bf16.msra.mxu0 %v415
    %432 = vmatprep.subr.bf16.mxu0 0
    %433 = vmatpush1.bf16.msra.mxu0 %v414
    %434 = vmatprep.subr.bf16.mxu0 0
    %435 = vmatpush1.bf16.msra.mxu0 %v413
    %436 = vmatprep.subr.bf16.mxu0 0
    %437 = vmatpush1.bf16.msra.mxu0 %v412
    %438 = vmatprep.subr.bf16.mxu0 0
    %439 = vmatpush1.bf16.msra.mxu0 %v411
    %440 = vmatprep.subr.bf16.mxu0 0
    %441 = vmatpush1.bf16.msra.mxu0 %v410
    %442 = vmatprep.subr.bf16.mxu0 0
    %443 = vmatpush2.bf16.msra.mxu0 0
    %444 = vmatprep.subr.bf16.mxu0 0
    %445 = vmatpush2.bf16.msra.mxu0 0
    %446 = vmatprep.subr.bf16.mxu0 0
    %447 = vmatpush2.bf16.msra.mxu0 0
    %448 = vmatprep.subr.bf16.mxu0 0
    %449 = vmatpush2.bf16.msra.mxu0 0
    %450 = vmatprep.subr.bf16.mxu0 0
    %451 = vmatpush2.bf16.msra.mxu0 0
    %452 = vmatprep.subr.bf16.mxu0 0
    %453 = vmatpush2.bf16.msra.mxu0 0
    %454 = vmatprep.subr.bf16.mxu0 0
    %455 = vmatpush2.bf16.msra.mxu0 0
    %456 = vmatprep.subr.bf16.mxu0 0
    %457 = vmatpush2.bf16.msra.mxu0 0
    %458 = vmatprep.mubr.bf16.mxu0 0
    %459 = vmatmul.mubr.bf16.gmra.mxu0 %v354
    %v460 = vpop.f32.mrf.mxu0
    %v461 = vadd.f32 %v376, %v460
    %v462 = vpop.f32.mrf.mxu0
    %v463 = vpop.f32.mrf.mxu0
    %v464 = vadd.f32 %v376, %v463
    %v465 = vpop.f32.mrf.mxu0
    %466 = vdwg.mxu0
    %467 = vst.msk [vmem:[#allocation2] sm:$0xff] %vm62, %v461
    %468 = vst.msk [vmem:[#allocation2 + $0x8] sm:$0xff] %vm62, %v464
    // Predicated region
    $region18: #{tpu_custom_call.1} parent=1 // pred_check
      _
    $region19: #{tpu_custom_call.1} parent=1 // pred_check_branch
      %470 = sbr.rel (0) target = $region21
    $region20: #{tpu_custom_call.1} parent=1 // pred_region
      %s472 = ssub.s32 256, 256
      %473 = vsyncadd [#allocation3], %s472
      %s474 = sshll.u32 [#allocation2], 4
      %s475 = int_to_ptr.vmem [resolvable:$true] %s474
      %480 = dma.vmem_to_hbm [thread:$0]  %s475, 256, %s4, [#allocation3], 128, 128, 8
    $region21: #{tpu_custom_call.1} parent=1 // pred_fallthru
      _
    // Predicated region
    $region22: #{tpu_custom_call.1} parent=1 // pred_check
      _
    $region23: #{tpu_custom_call.1} parent=1 // pred_check_branch
      %482 = sbr.rel (0) target = $region25
    $region24: #{tpu_custom_call.1} parent=1 // pred_region
      %483 = dma.done [#allocation3], 256
    $region25: #{tpu_custom_call.1} parent=1 // pred_fallthru
      _
    %484 = vsyncpa [#allocation3], 1

</llo_original>
